<compile_context>
chip_gen: v7x
topology: tpu7x:2x2x1
jax: 0.10.0
libtpu: 0.0.40
codegen_flags: <defaults>
</compile_context>

<pallas_src>
import functools

import jax
import jax.numpy as jnp
from jax.experimental import pallas as pl
from jax.experimental.pallas import tpu as pltpu


_LANE = 128                       # vreg lane width; batch tile is a multiple of this
_TILE_B_MAX = 512                 # cap so large B yields >=2 grid steps (v7x: 2 TCs)
_VMEM_BUDGET = 12 * 1024 * 1024   # stay under v5e's 16 MiB default scoped-VMEM limit


def _round_up(x, m):
    return ((x + m - 1) // m) * m


def _cdiv(a, b):
    return (a + b - 1) // b


def dqn_kernel(x_ref,
               w1, b1, w2, b2, w3, b3,          # encoder: in->h, h->h, h->feat
               w4, b4, w5, b5, w6, b6,          # head:    feat->h, h->h, h->out
               o_ref, *, use_bf16):
    """Batch-on-lanes fused DQN forward.

    x_ref : (inputs,  TILE_B)  -- batch samples on the 128-wide lane axis
    w*    : (out, in)          -- PyTorch-native nn.Linear weight layout
    b*    : (out, 1)           -- broadcasts across lanes (batch)
    o_ref : (outputs, TILE_B)  -- lane-dense output slab (unmasked vst)
    """
    x = x_ref[...]
    if use_bf16:
        x = x.astype(jnp.bfloat16)

    def linear(w_ref, b_ref, h):
        w = w_ref[...]
        if use_bf16:
            w = w.astype(jnp.bfloat16)
            h = h.astype(jnp.bfloat16)
        # (out, in) @ (in, TILE_B) -> (out, TILE_B); MXU N-dim = TILE_B >= 128.
        return jnp.dot(w, h, preferred_element_type=jnp.float32) + b_ref[...]

    # --- encoder MLP: Linear+ReLU, Linear+ReLU, Linear (identity) ---
    h = jnp.maximum(linear(w1, b1, x), 0.0)
    h = jnp.maximum(linear(w2, b2, h), 0.0)
    f = linear(w3, b3, h)

    # --- L2Norm: per sample (per lane), reduce over features (sublane axis, XLU).
    # rsqrt runs on the EUP slot.  No epsilon, matching the PyTorch L2Norm exactly
    # (a zero-norm sample would produce NaN, same as torch).
    inv_norm = jax.lax.rsqrt(jnp.sum(f * f, axis=0, keepdims=True))
    f = f * inv_norm

    # --- head MLP: Linear+ReLU, Linear+ReLU, Linear (identity) ---
    g = jnp.maximum(linear(w4, b4, f), 0.0)
    g = jnp.maximum(linear(w5, b5, g), 0.0)
    o_ref[...] = linear(w6, b6, g).astype(o_ref.dtype)


def init_linear(key, fan_in, fan_out, dtype=jnp.float32):
    """PyTorch nn.Linear default init: U(-1/sqrt(fan_in), 1/sqrt(fan_in)).
    Weight kept in PyTorch-native (out, in) layout; bias as (out, 1)."""
    kw, kb = jax.random.split(key)
    bound = 1.0 / (fan_in ** 0.5)
    w = jax.random.uniform(kw, (fan_out, fan_in), dtype, minval=-bound, maxval=bound)
    b = jax.random.uniform(kb, (fan_out, 1), dtype, minval=-bound, maxval=bound)
    return w, b


def make_dqn_params(key, inputs, outputs, hiddens, feature_size):
    ks = jax.random.split(key, 6)
    w1, b1 = init_linear(ks[0], inputs, hiddens)
    w2, b2 = init_linear(ks[1], hiddens, hiddens)
    w3, b3 = init_linear(ks[2], hiddens, feature_size)
    w4, b4 = init_linear(ks[3], feature_size, hiddens)
    w5, b5 = init_linear(ks[4], hiddens, hiddens)
    w6, b6 = init_linear(ks[5], hiddens, outputs)
    return (w1, b1, w2, b2, w3, b3, w4, b4, w5, b5, w6, b6)


def _choose_tile_b(B, inputs, outputs, hiddens, feature, weight_bytes):
    """Lane-aligned batch tile that (a) fits the VMEM budget with the default
    double-buffered pipeline (x/out tiles + 2x resident weights + activation
    working set), (b) balances tiles so padding never ~2x's the work, and
    (c) gives >=2 grid steps once B spans two lane tiles so v7x's second
    TensorCore has work under dimension_semantics=('parallel',)."""
    # Per-sample (per lane column) f32 footprint estimate.
    per_col = 4 * (2 * inputs + 2 * outputs + 4 * hiddens + feature)
    avail = _VMEM_BUDGET - 2 * weight_bytes          # weights are double-buffered too
    cap = max(_LANE, (max(avail, 0) // per_col) // _LANE * _LANE)
    cap = min(cap, _TILE_B_MAX)
    min_tiles = 2 if B >= 2 * _LANE else 1
    n_tiles = max(min_tiles, _cdiv(B, cap))
    return min(cap, _round_up(_cdiv(B, n_tiles), _LANE))


@functools.partial(jax.jit, static_argnames=("outputs", "use_bf16"))
def dqn_forward(x, params, outputs, use_bf16=False):
    B, inputs = x.shape
    (w1, b1, w2, b2, w3, b3, w4, b4, w5, b5, w6, b6) = params
    hiddens = w1.shape[0]
    feature = w3.shape[0]
    weight_bytes = sum(int(p.size) * p.dtype.itemsize for p in params)

    tile_b = _choose_tile_b(B, inputs, outputs, hiddens, feature, weight_bytes)
    Bp = _round_up(B, tile_b)
    grid = (Bp // tile_b,)

    # Batch on the lane (last) axis: lane-dense compute + unmasked output stores.
    # The wrapper-side transposes are cheap XLA ops on tiny arrays.
    xT = x.T
    if Bp != B:
        # Padded samples run through the whole net (biases keep their L2 norm
        # nonzero); matmuls never mix lanes, and they are sliced off below.
        xT = jnp.pad(xT, ((0, 0), (0, Bp - B)))

    def const_spec(a):
        # Same block every grid step -> DMA'd once, stays VMEM-resident.
        return pl.BlockSpec(a.shape, lambda i: (0,) * a.ndim)

    in_specs = [pl.BlockSpec((inputs, tile_b), lambda i: (0, i))]
    in_specs += [const_spec(p) for p in params]
    out_specs = pl.BlockSpec((outputs, tile_b), lambda i: (0, i))

    flops = 2 * Bp * (inputs * hiddens + hiddens * hiddens + hiddens * feature
                      + feature * hiddens + hiddens * hiddens + hiddens * outputs)
    bytes_accessed = 4 * Bp * (inputs + outputs) + weight_bytes
    cost = pl.CostEstimate(flops=flops, transcendentals=Bp,
                           bytes_accessed=bytes_accessed)

    # Only raise the scoped-VMEM limit when the defaults (16 MiB v5e / 32 MiB
    # v6e,v7x) would not be enough for this tiling (never triggers at toy sizes).
    vmem_need = (2 * weight_bytes
                 + 2 * 4 * tile_b * (inputs + outputs)
                 + 4 * tile_b * (4 * hiddens + feature))
    compiler_kwargs = dict(dimension_semantics=("parallel",))
    if vmem_need > 14 * 1024 * 1024:
        compiler_kwargs["vmem_limit_bytes"] = int(
            min(vmem_need * 3 // 2, 60 * 1024 * 1024))

    out = pl.pallas_call(
        functools.partial(dqn_kernel, use_bf16=use_bf16),
        grid=grid,
        in_specs=in_specs,
        out_specs=out_specs,
        out_shape=jax.ShapeDtypeStruct((outputs, Bp), jnp.float32),
        compiler_params=pltpu.CompilerParams(**compiler_kwargs),
        cost_estimate=cost,
    )(xT, *params)

    return out[:, :B].T


def dqn_reference(x, params):
    (w1, b1, w2, b2, w3, b3, w4, b4, w5, b5, w6, b6) = params
    h = jnp.maximum(x @ w1.T + b1.T, 0.0)
    h = jnp.maximum(h @ w2.T + b2.T, 0.0)
    f = h @ w3.T + b3.T
    f = f / jnp.linalg.norm(f, axis=1, keepdims=True)
    g = jnp.maximum(f @ w4.T + b4.T, 0.0)
    g = jnp.maximum(g @ w5.T + b5.T, 0.0)
    return g @ w6.T + b6.T


if __name__ == "__main__":
    # Small shapes consistent with DQN(inputs, outputs, hiddens, feature_size)
    B, INPUTS, OUTPUTS, HIDDENS, FEATURE = 8, 32, 8, 32, 16

    key = jax.random.PRNGKey(0)
    k_x, k_p = jax.random.split(key)
    x = jax.random.normal(k_x, (B, INPUTS), dtype=jnp.float32)
    params = make_dqn_params(k_p, INPUTS, OUTPUTS, HIDDENS, FEATURE)

    out = jax.block_until_ready(dqn_forward(x, params, OUTPUTS))
    ref = dqn_reference(x, params)
    assert out.shape == (B, OUTPUTS)
    assert jnp.allclose(out, ref, atol=1e-5, rtol=1e-5), "mismatch vs reference"

    # Non-multiple batch: exercises balanced tiling + padding + 2-step grid.
    B2 = 300
    x2 = jax.random.normal(jax.random.PRNGKey(1), (B2, INPUTS), dtype=jnp.float32)
    out2 = jax.block_until_ready(dqn_forward(x2, params, OUTPUTS))
    ref2 = dqn_reference(x2, params)
    assert out2.shape == (B2, OUTPUTS)
    assert jnp.allclose(out2, ref2, atol=1e-5, rtol=1e-5), "mismatch vs reference (B=300)"

    # Batch just above a tile multiple: old policy padded 1025 -> 2048, new one
    # gives tile_b=384, grid=3 (also exercises the multi-step 'parallel' grid).
    B3 = 1025
    x3 = jax.random.normal(jax.random.PRNGKey(2), (B3, INPUTS), dtype=jnp.float32)
    out3 = jax.block_until_ready(dqn_forward(x3, params, OUTPUTS))
    ref3 = dqn_reference(x3, params)
    assert out3.shape == (B3, OUTPUTS)
    assert jnp.allclose(out3, ref3, atol=1e-5, rtol=1e-5), "mismatch vs reference (B=1025)"

    # Optional bf16-MXU path (f32 accumulation): looser tolerance.
    out_bf16 = jax.block_until_ready(dqn_forward(x2, params, OUTPUTS, use_bf16=True))
    assert out_bf16.shape == (B2, OUTPUTS)
    assert jnp.allclose(out_bf16, ref2, atol=1e-1, rtol=1e-1), "mismatch vs reference (bf16)"

    print("KERNEL_OK")
</pallas_src>

<mosaic_0001>
module attributes {stable_mosaic.version = 11 : i64} {
  func.func @dqn_kernel(%arg0: i32, %arg1: memref<32x128xf32, #tpu.memory_space<vmem>>, %arg2: memref<32x32xf32, #tpu.memory_space<vmem>>, %arg3: memref<32x1xf32, #tpu.memory_space<vmem>>, %arg4: memref<32x32xf32, #tpu.memory_space<vmem>>, %arg5: memref<32x1xf32, #tpu.memory_space<vmem>>, %arg6: memref<16x32xf32, #tpu.memory_space<vmem>>, %arg7: memref<16x1xf32, #tpu.memory_space<vmem>>, %arg8: memref<32x16xf32, #tpu.memory_space<vmem>>, %arg9: memref<32x1xf32, #tpu.memory_space<vmem>>, %arg10: memref<32x32xf32, #tpu.memory_space<vmem>>, %arg11: memref<32x1xf32, #tpu.memory_space<vmem>>, %arg12: memref<8x32xf32, #tpu.memory_space<vmem>>, %arg13: memref<8x1xf32, #tpu.memory_space<vmem>>, %arg14: memref<8x128xf32, #tpu.memory_space<vmem>>) attributes {dimension_semantics = [#tpu.dimension_semantics<parallel>], iteration_bounds = array<i64: 1>, scalar_prefetch = 0 : i64, scratch_operands = 0 : i64, tpu.core_type = #tpu.core_type<tc>, window_params = [{transform_indices = @transform_0, window_bounds = array<i64: 32, 128>}, {pipeline_mode = #tpu.pipeline_mode<synchronous>, transform_indices = @transform_1, window_bounds = array<i64: 32, 32>}, {pipeline_mode = #tpu.pipeline_mode<synchronous>, transform_indices = @transform_2, window_bounds = array<i64: 32, 1>}, {pipeline_mode = #tpu.pipeline_mode<synchronous>, transform_indices = @transform_3, window_bounds = array<i64: 32, 32>}, {pipeline_mode = #tpu.pipeline_mode<synchronous>, transform_indices = @transform_4, window_bounds = array<i64: 32, 1>}, {pipeline_mode = #tpu.pipeline_mode<synchronous>, transform_indices = @transform_5, window_bounds = array<i64: 16, 32>}, {pipeline_mode = #tpu.pipeline_mode<synchronous>, transform_indices = @transform_6, window_bounds = array<i64: 16, 1>}, {pipeline_mode = #tpu.pipeline_mode<synchronous>, transform_indices = @transform_7, window_bounds = array<i64: 32, 16>}, {pipeline_mode = #tpu.pipeline_mode<synchronous>, transform_indices = @transform_8, window_bounds = array<i64: 32, 1>}, {pipeline_mode = #tpu.pipeline_mode<synchronous>, transform_indices = @transform_9, window_bounds = array<i64: 32, 32>}, {pipeline_mode = #tpu.pipeline_mode<synchronous>, transform_indices = @transform_10, window_bounds = array<i64: 32, 1>}, {pipeline_mode = #tpu.pipeline_mode<synchronous>, transform_indices = @transform_11, window_bounds = array<i64: 8, 32>}, {pipeline_mode = #tpu.pipeline_mode<synchronous>, transform_indices = @transform_12, window_bounds = array<i64: 8, 1>}, {transform_indices = @transform_13, window_bounds = array<i64: 8, 128>}]} {
    %c0 = arith.constant 0 : index
    %c0_0 = arith.constant 0 : index
    %0 = vector.load %arg1[%c0, %c0_0] : memref<32x128xf32, #tpu.memory_space<vmem>>, vector<32x128xf32>
    %c0_1 = arith.constant 0 : index
    %c0_2 = arith.constant 0 : index
    %1 = vector.load %arg2[%c0_1, %c0_2] : memref<32x32xf32, #tpu.memory_space<vmem>>, vector<32x32xf32>
    %cst = arith.constant dense<0.000000e+00> : vector<32x128xf32>
    %2 = tpu.matmul %1, %0, %cst {dimension_numbers = #tpu.dot_dimension_numbers<[1], [0], [0], [1], [0, 0, 1, 1], [], []>} : vector<32x32xf32>, vector<32x128xf32>, vector<32x128xf32> -> vector<32x128xf32>
    %c0_3 = arith.constant 0 : index
    %c0_4 = arith.constant 0 : index
    %3 = vector.load %arg3[%c0_3, %c0_4] : memref<32x1xf32, #tpu.memory_space<vmem>>, vector<32x1xf32>
    %4 = vector.broadcast %3 : vector<32x1xf32> to vector<32x128xf32>
    %5 = arith.addf %2, %4 : vector<32x128xf32>
    %cst_5 = arith.constant 0.000000e+00 : f32
    %6 = vector.broadcast %cst_5 : f32 to vector<32x128xf32>
    %7 = arith.maximumf %5, %6 : vector<32x128xf32>
    %c0_6 = arith.constant 0 : index
    %c0_7 = arith.constant 0 : index
    %8 = vector.load %arg4[%c0_6, %c0_7] : memref<32x32xf32, #tpu.memory_space<vmem>>, vector<32x32xf32>
    %cst_8 = arith.constant dense<0.000000e+00> : vector<32x128xf32>
    %9 = tpu.matmul %8, %7, %cst_8 {dimension_numbers = #tpu.dot_dimension_numbers<[1], [0], [0], [1], [0, 0, 1, 1], [], []>} : vector<32x32xf32>, vector<32x128xf32>, vector<32x128xf32> -> vector<32x128xf32>
    %c0_9 = arith.constant 0 : index
    %c0_10 = arith.constant 0 : index
    %10 = vector.load %arg5[%c0_9, %c0_10] : memref<32x1xf32, #tpu.memory_space<vmem>>, vector<32x1xf32>
    %11 = vector.broadcast %10 : vector<32x1xf32> to vector<32x128xf32>
    %12 = arith.addf %9, %11 : vector<32x128xf32>
    %cst_11 = arith.constant 0.000000e+00 : f32
    %13 = vector.broadcast %cst_11 : f32 to vector<32x128xf32>
    %14 = arith.maximumf %12, %13 : vector<32x128xf32>
    %c0_12 = arith.constant 0 : index
    %c0_13 = arith.constant 0 : index
    %15 = vector.load %arg6[%c0_12, %c0_13] : memref<16x32xf32, #tpu.memory_space<vmem>>, vector<16x32xf32>
    %cst_14 = arith.constant dense<0.000000e+00> : vector<16x128xf32>
    %16 = tpu.matmul %15, %14, %cst_14 {dimension_numbers = #tpu.dot_dimension_numbers<[1], [0], [0], [1], [0, 0, 1, 1], [], []>} : vector<16x32xf32>, vector<32x128xf32>, vector<16x128xf32> -> vector<16x128xf32>
    %c0_15 = arith.constant 0 : index
    %c0_16 = arith.constant 0 : index
    %17 = vector.load %arg7[%c0_15, %c0_16] : memref<16x1xf32, #tpu.memory_space<vmem>>, vector<16x1xf32>
    %18 = vector.broadcast %17 : vector<16x1xf32> to vector<16x128xf32>
    %19 = arith.addf %16, %18 : vector<16x128xf32>
    %20 = arith.mulf %19, %19 : vector<16x128xf32>
    %cst_17 = arith.constant dense<0.000000e+00> : vector<128xf32>
    %21 = vector.multi_reduction <add>, %20, %cst_17 [0] : vector<16x128xf32> to vector<128xf32>
    %22 = vector.shape_cast %21 : vector<128xf32> to vector<1x128xf32>
    %23 = math.rsqrt %22 : vector<1x128xf32>
    %24 = vector.broadcast %23 : vector<1x128xf32> to vector<16x128xf32>
    %25 = arith.mulf %19, %24 : vector<16x128xf32>
    %c0_18 = arith.constant 0 : index
    %c0_19 = arith.constant 0 : index
    %26 = vector.load %arg8[%c0_18, %c0_19] : memref<32x16xf32, #tpu.memory_space<vmem>>, vector<32x16xf32>
    %cst_20 = arith.constant dense<0.000000e+00> : vector<32x128xf32>
    %27 = tpu.matmul %26, %25, %cst_20 {dimension_numbers = #tpu.dot_dimension_numbers<[1], [0], [0], [1], [0, 0, 1, 1], [], []>} : vector<32x16xf32>, vector<16x128xf32>, vector<32x128xf32> -> vector<32x128xf32>
    %c0_21 = arith.constant 0 : index
    %c0_22 = arith.constant 0 : index
    %28 = vector.load %arg9[%c0_21, %c0_22] : memref<32x1xf32, #tpu.memory_space<vmem>>, vector<32x1xf32>
    %29 = vector.broadcast %28 : vector<32x1xf32> to vector<32x128xf32>
    %30 = arith.addf %27, %29 : vector<32x128xf32>
    %cst_23 = arith.constant 0.000000e+00 : f32
    %31 = vector.broadcast %cst_23 : f32 to vector<32x128xf32>
    %32 = arith.maximumf %30, %31 : vector<32x128xf32>
    %c0_24 = arith.constant 0 : index
    %c0_25 = arith.constant 0 : index
    %33 = vector.load %arg10[%c0_24, %c0_25] : memref<32x32xf32, #tpu.memory_space<vmem>>, vector<32x32xf32>
    %cst_26 = arith.constant dense<0.000000e+00> : vector<32x128xf32>
    %34 = tpu.matmul %33, %32, %cst_26 {dimension_numbers = #tpu.dot_dimension_numbers<[1], [0], [0], [1], [0, 0, 1, 1], [], []>} : vector<32x32xf32>, vector<32x128xf32>, vector<32x128xf32> -> vector<32x128xf32>
    %c0_27 = arith.constant 0 : index
    %c0_28 = arith.constant 0 : index
    %35 = vector.load %arg11[%c0_27, %c0_28] : memref<32x1xf32, #tpu.memory_space<vmem>>, vector<32x1xf32>
    %36 = vector.broadcast %35 : vector<32x1xf32> to vector<32x128xf32>
    %37 = arith.addf %34, %36 : vector<32x128xf32>
    %cst_29 = arith.constant 0.000000e+00 : f32
    %38 = vector.broadcast %cst_29 : f32 to vector<32x128xf32>
    %39 = arith.maximumf %37, %38 : vector<32x128xf32>
    %c0_30 = arith.constant 0 : index
    %c0_31 = arith.constant 0 : index
    %40 = vector.load %arg12[%c0_30, %c0_31] : memref<8x32xf32, #tpu.memory_space<vmem>>, vector<8x32xf32>
    %cst_32 = arith.constant dense<0.000000e+00> : vector<8x128xf32>
    %41 = tpu.matmul %40, %39, %cst_32 {dimension_numbers = #tpu.dot_dimension_numbers<[1], [0], [0], [1], [0, 0, 1, 1], [], []>} : vector<8x32xf32>, vector<32x128xf32>, vector<8x128xf32> -> vector<8x128xf32>
    %c0_33 = arith.constant 0 : index
    %c0_34 = arith.constant 0 : index
    %42 = vector.load %arg13[%c0_33, %c0_34] : memref<8x1xf32, #tpu.memory_space<vmem>>, vector<8x1xf32>
    %43 = vector.broadcast %42 : vector<8x1xf32> to vector<8x128xf32>
    %44 = arith.addf %41, %43 : vector<8x128xf32>
    %c0_35 = arith.constant 0 : index
    %c0_36 = arith.constant 0 : index
    %45 = vector.load %arg14[%c0_35, %c0_36] : memref<8x128xf32, #tpu.memory_space<vmem>>, vector<8x128xf32>
    tpu.vector_store %arg14[%c0_35, %c0_36], %44 {strides = array<i32>} : memref<8x128xf32, #tpu.memory_space<vmem>>, vector<8x128xf32>,
    return
  }
  func.func @transform_0(%arg0: i32) -> (i32, i32) {
    %c0_i32 = arith.constant 0 : i32
    %c0_i32_0 = arith.constant 0 : i32
    return %c0_i32, %arg0 : i32, i32
  }
  func.func @transform_1(%arg0: i32) -> (i32, i32) {
    %c0_i32 = arith.constant 0 : i32
    %c0_i32_0 = arith.constant 0 : i32
    %c0_i32_1 = arith.constant 0 : i32
    return %c0_i32, %c0_i32_0 : i32, i32
  }
  func.func @transform_2(%arg0: i32) -> (i32, i32) {
    %c0_i32 = arith.constant 0 : i32
    %c0_i32_0 = arith.constant 0 : i32
    %c0_i32_1 = arith.constant 0 : i32
    return %c0_i32, %c0_i32_0 : i32, i32
  }
  func.func @transform_3(%arg0: i32) -> (i32, i32) {
    %c0_i32 = arith.constant 0 : i32
    %c0_i32_0 = arith.constant 0 : i32
    %c0_i32_1 = arith.constant 0 : i32
    return %c0_i32, %c0_i32_0 : i32, i32
  }
  func.func @transform_4(%arg0: i32) -> (i32, i32) {
    %c0_i32 = arith.constant 0 : i32
    %c0_i32_0 = arith.constant 0 : i32
    %c0_i32_1 = arith.constant 0 : i32
    return %c0_i32, %c0_i32_0 : i32, i32
  }
  func.func @transform_5(%arg0: i32) -> (i32, i32) {
    %c0_i32 = arith.constant 0 : i32
    %c0_i32_0 = arith.constant 0 : i32
    %c0_i32_1 = arith.constant 0 : i32
    return %c0_i32, %c0_i32_0 : i32, i32
  }
  func.func @transform_6(%arg0: i32) -> (i32, i32) {
    %c0_i32 = arith.constant 0 : i32
    %c0_i32_0 = arith.constant 0 : i32
    %c0_i32_1 = arith.constant 0 : i32
    return %c0_i32, %c0_i32_0 : i32, i32
  }
  func.func @transform_7(%arg0: i32) -> (i32, i32) {
    %c0_i32 = arith.constant 0 : i32
    %c0_i32_0 = arith.constant 0 : i32
    %c0_i32_1 = arith.constant 0 : i32
    return %c0_i32, %c0_i32_0 : i32, i32
  }
  func.func @transform_8(%arg0: i32) -> (i32, i32) {
    %c0_i32 = arith.constant 0 : i32
    %c0_i32_0 = arith.constant 0 : i32
    %c0_i32_1 = arith.constant 0 : i32
    return %c0_i32, %c0_i32_0 : i32, i32
  }
  func.func @transform_9(%arg0: i32) -> (i32, i32) {
    %c0_i32 = arith.constant 0 : i32
    %c0_i32_0 = arith.constant 0 : i32
    %c0_i32_1 = arith.constant 0 : i32
    return %c0_i32, %c0_i32_0 : i32, i32
  }
  func.func @transform_10(%arg0: i32) -> (i32, i32) {
    %c0_i32 = arith.constant 0 : i32
    %c0_i32_0 = arith.constant 0 : i32
    %c0_i32_1 = arith.constant 0 : i32
    return %c0_i32, %c0_i32_0 : i32, i32
  }
  func.func @transform_11(%arg0: i32) -> (i32, i32) {
    %c0_i32 = arith.constant 0 : i32
    %c0_i32_0 = arith.constant 0 : i32
    %c0_i32_1 = arith.constant 0 : i32
    return %c0_i32, %c0_i32_0 : i32, i32
  }
  func.func @transform_12(%arg0: i32) -> (i32, i32) {
    %c0_i32 = arith.constant 0 : i32
    %c0_i32_0 = arith.constant 0 : i32
    %c0_i32_1 = arith.constant 0 : i32
    return %c0_i32, %c0_i32_0 : i32, i32
  }
  func.func @transform_13(%arg0: i32) -> (i32, i32) {
    %c0_i32 = arith.constant 0 : i32
    %c0_i32_0 = arith.constant 0 : i32
    return %c0_i32, %arg0 : i32, i32
  }
}

</mosaic_0001>

<llo_original>
// kernel: dqn_forward.1
$region0: #{dqn_forward.1}
  #allocation0 [shape = 'u32[]', space=smem, size = 0x4, offset = 0x4, fixed_abs, tag = 'smem constant byte address 0x4 - core index']
  #allocation1 [shape = 'u32[144,128]{1,0:T(1,128)}', space=vmem, size = 0x12000, scoped, tag = 'internal scratch']
  %s0 = inlined_call_operand.vmem [shape: f32[32,128], index: 0, kind: input, shape index: {}]
  %s1 = inlined_call_operand.vmem [shape: f32[32,32], index: 1, kind: input, shape index: {}]
  %s2 = inlined_call_operand.vmem [shape: f32[32,1], index: 2, kind: input, shape index: {}]
  %s3 = inlined_call_operand.vmem [shape: f32[32,32], index: 3, kind: input, shape index: {}]
  %s4 = inlined_call_operand.vmem [shape: f32[32,1], index: 4, kind: input, shape index: {}]
  %s5 = inlined_call_operand.vmem [shape: f32[16,32], index: 5, kind: input, shape index: {}]
  %s6 = inlined_call_operand.vmem [shape: f32[16,1], index: 6, kind: input, shape index: {}]
  %s7 = inlined_call_operand.vmem [shape: f32[32,16], index: 7, kind: input, shape index: {}]
  %s8 = inlined_call_operand.vmem [shape: f32[32,1], index: 8, kind: input, shape index: {}]
  %s9 = inlined_call_operand.vmem [shape: f32[32,32], index: 9, kind: input, shape index: {}]
  %s10 = inlined_call_operand.vmem [shape: f32[32,1], index: 10, kind: input, shape index: {}]
  %s11 = inlined_call_operand.vmem [shape: f32[8,32], index: 11, kind: input, shape index: {}]
  %s12 = inlined_call_operand.vmem [shape: f32[8,1], index: 12, kind: input, shape index: {}]
  %s13 = inlined_call_operand.vmem [shape: f32[8,128], index: 13, kind: output, shape index: {}]
  %s14 = sld [smem:[#allocation0]]
  $region62: #{dqn_forward.1} parent=0
    _
  %s16 = ssub.s32 1, %s14
  %s17 = scalar_select 0, %s16, %s14
  // Predicated region
  $region2: #{dqn_forward.1} parent=0 // pred_check
    _
  $region3: #{dqn_forward.1} parent=0 // pred_check_branch
    %19 = sbr.rel (0) target = $region5
  $region4: #{dqn_forward.1} parent=0 // pred_region
    _
  $region5: #{dqn_forward.1} parent=0 // pred_fallthru
    _
  // Predicated region
  $region6: #{dqn_forward.1} parent=0 // pred_check
    _
  $region7: #{dqn_forward.1} parent=0 // pred_check_branch
    %21 = sbr.rel (0) target = $region9
  $region8: #{dqn_forward.1} parent=0 // pred_region
    _
  $region9: #{dqn_forward.1} parent=0 // pred_fallthru
    _
  // Predicated region
  $region10: #{dqn_forward.1} parent=0 // pred_check
    _
  $region11: #{dqn_forward.1} parent=0 // pred_check_branch
    %23 = sbr.rel (0) target = $region13
  $region12: #{dqn_forward.1} parent=0 // pred_region
    _
  $region13: #{dqn_forward.1} parent=0 // pred_fallthru
    _
  // Predicated region
  $region14: #{dqn_forward.1} parent=0 // pred_check
    _
  $region15: #{dqn_forward.1} parent=0 // pred_check_branch
    %25 = sbr.rel (0) target = $region17
  $region16: #{dqn_forward.1} parent=0 // pred_region
    _
  $region17: #{dqn_forward.1} parent=0 // pred_fallthru
    _
  // Predicated region
  $region18: #{dqn_forward.1} parent=0 // pred_check
    _
  $region19: #{dqn_forward.1} parent=0 // pred_check_branch
    %27 = sbr.rel (0) target = $region21
  $region20: #{dqn_forward.1} parent=0 // pred_region
    _
  $region21: #{dqn_forward.1} parent=0 // pred_fallthru
    _
  // Predicated region
  $region22: #{dqn_forward.1} parent=0 // pred_check
    _
  $region23: #{dqn_forward.1} parent=0 // pred_check_branch
    %29 = sbr.rel (0) target = $region25
  $region24: #{dqn_forward.1} parent=0 // pred_region
    _
  $region25: #{dqn_forward.1} parent=0 // pred_fallthru
    _
  // Predicated region
  $region26: #{dqn_forward.1} parent=0 // pred_check
    _
  $region27: #{dqn_forward.1} parent=0 // pred_check_branch
    %31 = sbr.rel (0) target = $region29
  $region28: #{dqn_forward.1} parent=0 // pred_region
    _
  $region29: #{dqn_forward.1} parent=0 // pred_fallthru
    _
  // Predicated region
  $region30: #{dqn_forward.1} parent=0 // pred_check
    _
  $region31: #{dqn_forward.1} parent=0 // pred_check_branch
    %33 = sbr.rel (0) target = $region33
  $region32: #{dqn_forward.1} parent=0 // pred_region
    _
  $region33: #{dqn_forward.1} parent=0 // pred_fallthru
    _
  // Predicated region
  $region34: #{dqn_forward.1} parent=0 // pred_check
    _
  $region35: #{dqn_forward.1} parent=0 // pred_check_branch
    %35 = sbr.rel (0) target = $region37
  $region36: #{dqn_forward.1} parent=0 // pred_region
    _
  $region37: #{dqn_forward.1} parent=0 // pred_fallthru
    _
  // Predicated region
  $region38: #{dqn_forward.1} parent=0 // pred_check
    _
  $region39: #{dqn_forward.1} parent=0 // pred_check_branch
    %37 = sbr.rel (0) target = $region41
  $region40: #{dqn_forward.1} parent=0 // pred_region
    _
  $region41: #{dqn_forward.1} parent=0 // pred_fallthru
    _
  // Predicated region
  $region42: #{dqn_forward.1} parent=0 // pred_check
    _
  $region43: #{dqn_forward.1} parent=0 // pred_check_branch
    %39 = sbr.rel (0) target = $region45
  $region44: #{dqn_forward.1} parent=0 // pred_region
    _
  $region45: #{dqn_forward.1} parent=0 // pred_fallthru
    _
  // Predicated region
  $region46: #{dqn_forward.1} parent=0 // pred_check
    _
  $region47: #{dqn_forward.1} parent=0 // pred_check_branch
    %41 = sbr.rel (0) target = $region49
  $region48: #{dqn_forward.1} parent=0 // pred_region
    _
  $region49: #{dqn_forward.1} parent=0 // pred_fallthru
    _
  // Predicated region
  $region50: #{dqn_forward.1} parent=0 // pred_check
    _
  $region51: #{dqn_forward.1} parent=0 // pred_check_branch
    %43 = sbr.rel (0) target = $region53
  $region52: #{dqn_forward.1} parent=0 // pred_region
    _
  $region53: #{dqn_forward.1} parent=0 // pred_fallthru
    _
  %v44 = vld [vmem:[%s0] sm:$0xff]
  %v45 = vld [vmem:[%s0 + $0x8] sm:$0xff]
  %v46 = vld [vmem:[%s0 + $0x10] sm:$0xff]
  %v47 = vld [vmem:[%s0 + $0x18] sm:$0xff]
  %v48 = vld [vmem:[%s1] sm:$0xff]
  %v49 = vld [vmem:[%s1 + $0x8] sm:$0xff]
  %v50 = vld [vmem:[%s1 + $0x10] sm:$0xff]
  %v51 = vld [vmem:[%s1 + $0x18] sm:$0xff]
  %v52 = vld [vmem:[%s2] sm:$0xff]
  %v53 = vld [vmem:[%s2 + $0x8] sm:$0xff]
  %v54 = vld [vmem:[%s2 + $0x10] sm:$0xff]
  %v55 = vld [vmem:[%s2 + $0x18] sm:$0xff]
  %57 = vset.pattern.permute.xlu0 0
  %58 = vperm.xlu0 %57, %v52
  %v59 = vpop.permute.xlu0 %58
  %62 = vset.pattern.permute.xlu0 0
  %63 = vperm.xlu0 %62, %v53
  %v64 = vpop.permute.xlu0 %63
  %67 = vset.pattern.permute.xlu0 0
  %68 = vperm.xlu0 %67, %v54
  %v69 = vpop.permute.xlu0 %68
  %72 = vset.pattern.permute.xlu0 0
  %73 = vperm.xlu0 %72, %v55
  %v74 = vpop.permute.xlu0 %73
  %vm76 = vcmask 261120
  %v78 = vsel %vm76, %v48, 0
  %v81 = vsel %vm76, %v49, 0
  %v84 = vsel %vm76, %v50, 0
  %v87 = vsel %vm76, %v51, 0
  %89 = vmatprep.subr.mxu0 0.0
  %90 = vmatpush1.msra.mxu0 %v44
  %91 = vmatprep.subr.mxu0 0.0
  %92 = vmatpush1.msra.mxu0 %v45
  %93 = vmatprep.subr.mxu0 0.0
  %94 = vmatpush1.msra.mxu0 %v46
  %95 = vmatprep.subr.mxu0 0.0
  %96 = vmatpush1.msra.mxu0 %v47
  %97 = vmatprep.subr.mxu0 0.0
  %98 = vmatpush1.msra.mxu0 0.0
  %99 = vmatprep.subr.mxu0 0.0
  %100 = vmatpush1.msra.mxu0 0.0
  %101 = vmatprep.subr.mxu0 0.0
  %102 = vmatpush1.msra.mxu0 0.0
  %103 = vmatprep.subr.mxu0 0.0
  %104 = vmatpush1.msra.mxu0 0.0
  %105 = vmatprep.subr.mxu0 0.0
  %106 = vmatpush1.msra.mxu0 0.0
  %107 = vmatprep.subr.mxu0 0.0
  %108 = vmatpush1.msra.mxu0 0.0
  %109 = vmatprep.subr.mxu0 0.0
  %110 = vmatpush1.msra.mxu0 0.0
  %111 = vmatprep.subr.mxu0 0.0
  %112 = vmatpush1.msra.mxu0 0.0
  %113 = vmatprep.subr.mxu0 0.0
  %114 = vmatpush1.msra.mxu0 0.0
  %115 = vmatprep.subr.mxu0 0.0
  %116 = vmatpush1.msra.mxu0 0.0
  %117 = vmatprep.subr.mxu0 0.0
  %118 = vmatpush1.msra.mxu0 0.0
  %119 = vmatprep.subr.mxu0 0.0
  %120 = vmatpush1.msra.mxu0 0.0
  %121 = vmatprep.subr.mxu0 0.0
  %122 = vmatpush1.msra.mxu0 0.0
  %123 = vmatprep.subr.mxu0 0.0
  %124 = vmatpush1.msra.mxu0 0.0
  %125 = vmatprep.subr.mxu0 0.0
  %126 = vmatpush1.msra.mxu0 0.0
  %127 = vmatprep.subr.mxu0 0.0
  %128 = vmatpush1.msra.mxu0 0.0
  %129 = vmatprep.subr.mxu0 0.0
  %130 = vmatpush1.msra.mxu0 0.0
  %131 = vmatprep.subr.mxu0 0.0
  %132 = vmatpush1.msra.mxu0 0.0
  %133 = vmatprep.subr.mxu0 0.0
  %134 = vmatpush1.msra.mxu0 0.0
  %135 = vmatprep.subr.mxu0 0.0
  %136 = vmatpush1.msra.mxu0 0.0
  %137 = vmatprep.subr.mxu0 0.0
  %138 = vmatpush1.msra.mxu0 0.0
  %139 = vmatprep.subr.mxu0 0.0
  %140 = vmatpush1.msra.mxu0 0.0
  %141 = vmatprep.subr.mxu0 0.0
  %142 = vmatpush1.msra.mxu0 0.0
  %143 = vmatprep.subr.mxu0 0.0
  %144 = vmatpush1.msra.mxu0 0.0
  %145 = vmatprep.subr.mxu0 0.0
  %146 = vmatpush1.msra.mxu0 0.0
  %147 = vmatprep.subr.mxu0 0.0
  %148 = vmatpush1.msra.mxu0 0.0
  %149 = vmatprep.subr.mxu0 0.0
  %150 = vmatpush1.msra.mxu0 0.0
  %151 = vmatprep.subr.mxu0 0.0
  %152 = vmatpush1.msra.mxu0 0.0
  %153 = vmatprep.mubr.f32.mxu0 0.0
  %154 = vmatmul.mubr.f32.gmra.mrb[0].mxu0 %v78
  %v155 = vpop.f32.mrb[0].mxu0
  %v156 = vadd.f32 %v59, %v155
  %v157 = vpop.f32.mrb[0].mxu0
  %158 = vmatprep.mubr.f32.mxu0 0.0
  %159 = vmatmul.mubr.f32.gmra.mrb[0].mxu0 %v81
  %v160 = vpop.f32.mrb[0].mxu0
  %v161 = vadd.f32 %v64, %v160
  %v162 = vpop.f32.mrb[0].mxu0
  %163 = vmatprep.mubr.f32.mxu0 0.0
  %164 = vmatmul.mubr.f32.gmra.mrb[0].mxu0 %v84
  %v165 = vpop.f32.mrb[0].mxu0
  %v166 = vadd.f32 %v69, %v165
  %v167 = vpop.f32.mrb[0].mxu0
  %168 = vmatprep.mubr.f32.mxu0 0.0
  %169 = vmatmul.mubr.f32.gmra.mrb[0].mxu0 %v87
  %v170 = vpop.f32.mrb[0].mxu0
  %v171 = vadd.f32 %v74, %v170
  %v172 = vpop.f32.mrb[0].mxu0
  %173 = vdwg.mxu0
  %v174 = vmax.f32 %v156, 0.0
  %v175 = vmax.f32 %v161, 0.0
  %v176 = vmax.f32 %v166, 0.0
  %v177 = vmax.f32 %v171, 0.0
  %v178 = vld [vmem:[%s3] sm:$0xff]
  %v179 = vld [vmem:[%s3 + $0x8] sm:$0xff]
  %v180 = vld [vmem:[%s3 + $0x10] sm:$0xff]
  %v181 = vld [vmem:[%s3 + $0x18] sm:$0xff]
  %v182 = vld [vmem:[%s4] sm:$0xff]
  %v183 = vld [vmem:[%s4 + $0x8] sm:$0xff]
  %v184 = vld [vmem:[%s4 + $0x10] sm:$0xff]
  %v185 = vld [vmem:[%s4 + $0x18] sm:$0xff]
  %187 = vset.pattern.permute.xlu0 0
  %188 = vperm.xlu0 %187, %v182
  %v189 = vpop.permute.xlu0 %188
  %192 = vset.pattern.permute.xlu0 0
  %193 = vperm.xlu0 %192, %v183
  %v194 = vpop.permute.xlu0 %193
  %197 = vset.pattern.permute.xlu0 0
  %198 = vperm.xlu0 %197, %v184
  %v199 = vpop.permute.xlu0 %198
  %202 = vset.pattern.permute.xlu0 0
  %203 = vperm.xlu0 %202, %v185
  %v204 = vpop.permute.xlu0 %203
  %v207 = vsel %vm76, %v178, 0
  %v210 = vsel %vm76, %v179, 0
  %v213 = vsel %vm76, %v180, 0
  %v216 = vsel %vm76, %v181, 0
  %218 = vmatprep.subr.mxu0 0.0
  %219 = vmatpush1.msra.mxu0 %v174
  %220 = vmatprep.subr.mxu0 0.0
  %221 = vmatpush1.msra.mxu0 %v175
  %222 = vmatprep.subr.mxu0 0.0
  %223 = vmatpush1.msra.mxu0 %v176
  %224 = vmatprep.subr.mxu0 0.0
  %225 = vmatpush1.msra.mxu0 %v177
  %226 = vmatprep.subr.mxu0 0.0
  %227 = vmatpush1.msra.mxu0 0.0
  %228 = vmatprep.subr.mxu0 0.0
  %229 = vmatpush1.msra.mxu0 0.0
  %230 = vmatprep.subr.mxu0 0.0
  %231 = vmatpush1.msra.mxu0 0.0
  %232 = vmatprep.subr.mxu0 0.0
  %233 = vmatpush1.msra.mxu0 0.0
  %234 = vmatprep.subr.mxu0 0.0
  %235 = vmatpush1.msra.mxu0 0.0
  %236 = vmatprep.subr.mxu0 0.0
  %237 = vmatpush1.msra.mxu0 0.0
  %238 = vmatprep.subr.mxu0 0.0
  %239 = vmatpush1.msra.mxu0 0.0
  %240 = vmatprep.subr.mxu0 0.0
  %241 = vmatpush1.msra.mxu0 0.0
  %242 = vmatprep.subr.mxu0 0.0
  %243 = vmatpush1.msra.mxu0 0.0
  %244 = vmatprep.subr.mxu0 0.0
  %245 = vmatpush1.msra.mxu0 0.0
  %246 = vmatprep.subr.mxu0 0.0
  %247 = vmatpush1.msra.mxu0 0.0
  %248 = vmatprep.subr.mxu0 0.0
  %249 = vmatpush1.msra.mxu0 0.0
  %250 = vmatprep.subr.mxu0 0.0
  %251 = vmatpush1.msra.mxu0 0.0
  %252 = vmatprep.subr.mxu0 0.0
  %253 = vmatpush1.msra.mxu0 0.0
  %254 = vmatprep.subr.mxu0 0.0
  %255 = vmatpush1.msra.mxu0 0.0
  %256 = vmatprep.subr.mxu0 0.0
  %257 = vmatpush1.msra.mxu0 0.0
  %258 = vmatprep.subr.mxu0 0.0
  %259 = vmatpush1.msra.mxu0 0.0
  %260 = vmatprep.subr.mxu0 0.0
  %261 = vmatpush1.msra.mxu0 0.0
  %262 = vmatprep.subr.mxu0 0.0
  %263 = vmatpush1.msra.mxu0 0.0
  %264 = vmatprep.subr.mxu0 0.0
  %265 = vmatpush1.msra.mxu0 0.0
  %266 = vmatprep.subr.mxu0 0.0
  %267 = vmatpush1.msra.mxu0 0.0
  %268 = vmatprep.subr.mxu0 0.0
  %269 = vmatpush1.msra.mxu0 0.0
  %270 = vmatprep.subr.mxu0 0.0
  %271 = vmatpush1.msra.mxu0 0.0
  %272 = vmatprep.subr.mxu0 0.0
  %273 = vmatpush1.msra.mxu0 0.0
  %274 = vmatprep.subr.mxu0 0.0
  %275 = vmatpush1.msra.mxu0 0.0
  %276 = vmatprep.subr.mxu0 0.0
  %277 = vmatpush1.msra.mxu0 0.0
  %278 = vmatprep.subr.mxu0 0.0
  %279 = vmatpush1.msra.mxu0 0.0
  %280 = vmatprep.subr.mxu0 0.0
  %281 = vmatpush1.msra.mxu0 0.0
  %282 = vmatprep.mubr.f32.mxu0 0.0
  %283 = vmatmul.mubr.f32.gmra.mrb[0].mxu0 %v207
  %v284 = vpop.f32.mrb[0].mxu0
  %v285 = vadd.f32 %v189, %v284
  %v286 = vpop.f32.mrb[0].mxu0
  %287 = vmatprep.mubr.f32.mxu0 0.0
  %288 = vmatmul.mubr.f32.gmra.mrb[0].mxu0 %v210
  %v289 = vpop.f32.mrb[0].mxu0
  %v290 = vadd.f32 %v194, %v289
  %v291 = vpop.f32.mrb[0].mxu0
  %292 = vmatprep.mubr.f32.mxu0 0.0
  %293 = vmatmul.mubr.f32.gmra.mrb[0].mxu0 %v213
  %v294 = vpop.f32.mrb[0].mxu0
  %v295 = vadd.f32 %v199, %v294
  %v296 = vpop.f32.mrb[0].mxu0
  %297 = vmatprep.mubr.f32.mxu0 0.0
  %298 = vmatmul.mubr.f32.gmra.mrb[0].mxu0 %v216
  %v299 = vpop.f32.mrb[0].mxu0
  %v300 = vadd.f32 %v204, %v299
  %v301 = vpop.f32.mrb[0].mxu0
  %302 = vdwg.mxu0
  %v303 = vmax.f32 %v285, 0.0
  %v304 = vmax.f32 %v290, 0.0
  %v305 = vmax.f32 %v295, 0.0
  %v306 = vmax.f32 %v300, 0.0
  %v307 = vld [vmem:[%s5] sm:$0xff]
  %v308 = vld [vmem:[%s5 + $0x8] sm:$0xff]
  %v309 = vld [vmem:[%s6] sm:$0xff]
  %v310 = vld [vmem:[%s6 + $0x8] sm:$0xff]
  %312 = vset.pattern.permute.xlu0 0
  %313 = vperm.xlu0 %312, %v309
  %v314 = vpop.permute.xlu0 %313
  %317 = vset.pattern.permute.xlu0 0
  %318 = vperm.xlu0 %317, %v310
  %v319 = vpop.permute.xlu0 %318
  %v322 = vsel %vm76, %v307, 0
  %v325 = vsel %vm76, %v308, 0
  %327 = vmatprep.subr.mxu0 0.0
  %328 = vmatpush1.msra.mxu0 %v303
  %329 = vmatprep.subr.mxu0 0.0
  %330 = vmatpush1.msra.mxu0 %v304
  %331 = vmatprep.subr.mxu0 0.0
  %332 = vmatpush1.msra.mxu0 %v305
  %333 = vmatprep.subr.mxu0 0.0
  %334 = vmatpush1.msra.mxu0 %v306
  %335 = vmatprep.subr.mxu0 0.0
  %336 = vmatpush1.msra.mxu0 0.0
  %337 = vmatprep.subr.mxu0 0.0
  %338 = vmatpush1.msra.mxu0 0.0
  %339 = vmatprep.subr.mxu0 0.0
  %340 = vmatpush1.msra.mxu0 0.0
  %341 = vmatprep.subr.mxu0 0.0
  %342 = vmatpush1.msra.mxu0 0.0
  %343 = vmatprep.subr.mxu0 0.0
  %344 = vmatpush1.msra.mxu0 0.0
  %345 = vmatprep.subr.mxu0 0.0
  %346 = vmatpush1.msra.mxu0 0.0
  %347 = vmatprep.subr.mxu0 0.0
  %348 = vmatpush1.msra.mxu0 0.0
  %349 = vmatprep.subr.mxu0 0.0
  %350 = vmatpush1.msra.mxu0 0.0
  %351 = vmatprep.subr.mxu0 0.0
  %352 = vmatpush1.msra.mxu0 0.0
  %353 = vmatprep.subr.mxu0 0.0
  %354 = vmatpush1.msra.mxu0 0.0
  %355 = vmatprep.subr.mxu0 0.0
  %356 = vmatpush1.msra.mxu0 0.0
  %357 = vmatprep.subr.mxu0 0.0
  %358 = vmatpush1.msra.mxu0 0.0
  %359 = vmatprep.subr.mxu0 0.0
  %360 = vmatpush1.msra.mxu0 0.0
  %361 = vmatprep.subr.mxu0 0.0
  %362 = vmatpush1.msra.mxu0 0.0
  %363 = vmatprep.subr.mxu0 0.0
  %364 = vmatpush1.msra.mxu0 0.0
  %365 = vmatprep.subr.mxu0 0.0
  %366 = vmatpush1.msra.mxu0 0.0
  %367 = vmatprep.subr.mxu0 0.0
  %368 = vmatpush1.msra.mxu0 0.0
  %369 = vmatprep.subr.mxu0 0.0
  %370 = vmatpush1.msra.mxu0 0.0
  %371 = vmatprep.subr.mxu0 0.0
  %372 = vmatpush1.msra.mxu0 0.0
  %373 = vmatprep.subr.mxu0 0.0
  %374 = vmatpush1.msra.mxu0 0.0
  %375 = vmatprep.subr.mxu0 0.0
  %376 = vmatpush1.msra.mxu0 0.0
  %377 = vmatprep.subr.mxu0 0.0
  %378 = vmatpush1.msra.mxu0 0.0
  %379 = vmatprep.subr.mxu0 0.0
  %380 = vmatpush1.msra.mxu0 0.0
  %381 = vmatprep.subr.mxu0 0.0
  %382 = vmatpush1.msra.mxu0 0.0
  %383 = vmatprep.subr.mxu0 0.0
  %384 = vmatpush1.msra.mxu0 0.0
  %385 = vmatprep.subr.mxu0 0.0
  %386 = vmatpush1.msra.mxu0 0.0
  %387 = vmatprep.subr.mxu0 0.0
  %388 = vmatpush1.msra.mxu0 0.0
  %389 = vmatprep.subr.mxu0 0.0
  %390 = vmatpush1.msra.mxu0 0.0
  %391 = vmatprep.mubr.f32.mxu0 0.0
  %392 = vmatmul.mubr.f32.gmra.mrb[0].mxu0 %v322
  %v393 = vpop.f32.mrb[0].mxu0
  %v394 = vadd.f32 %v314, %v393
  %v395 = vpop.f32.mrb[0].mxu0
  %396 = vmatprep.mubr.f32.mxu0 0.0
  %397 = vmatmul.mubr.f32.gmra.mrb[0].mxu0 %v325
  %v398 = vpop.f32.mrb[0].mxu0
  %v399 = vadd.f32 %v319, %v398
  %v400 = vpop.f32.mrb[0].mxu0
  %401 = vdwg.mxu0
  %v402 = vmul.f32 %v394, %v394
  %v403 = vmul.f32 %v399, %v399
  %v404 = vadd.f32 %v402, %v403
  %v405 = vrot.slane %v404, 4
  %v406 = vadd.f32 %v404, %v405
  %v407 = vrot.slane %v406, 2
  %v408 = vadd.f32 %v406, %v407
  %v409 = vrot.slane %v408, 1
  %v410 = vadd.f32 %v408, %v409
  %v411 = vrsqrt.pop %v410
  %v412 = vmul.f32 %v394, %v411
  %v413 = vmul.f32 %v399, %v411
  %v414 = vld [vmem:[%s7] sm:$0xff]
  %v415 = vld [vmem:[%s7 + $0x8] sm:$0xff]
  %v416 = vld [vmem:[%s7 + $0x10] sm:$0xff]
  %v417 = vld [vmem:[%s7 + $0x18] sm:$0xff]
  %v418 = vld [vmem:[%s8] sm:$0xff]
  %v419 = vld [vmem:[%s8 + $0x8] sm:$0xff]
  %v420 = vld [vmem:[%s8 + $0x10] sm:$0xff]
  %v421 = vld [vmem:[%s8 + $0x18] sm:$0xff]
  %423 = vset.pattern.permute.xlu0 0
  %424 = vperm.xlu0 %423, %v418
  %v425 = vpop.permute.xlu0 %424
  %428 = vset.pattern.permute.xlu0 0
  %429 = vperm.xlu0 %428, %v419
  %v430 = vpop.permute.xlu0 %429
  %433 = vset.pattern.permute.xlu0 0
  %434 = vperm.xlu0 %433, %v420
  %v435 = vpop.permute.xlu0 %434
  %438 = vset.pattern.permute.xlu0 0
  %439 = vperm.xlu0 %438, %v421
  %v440 = vpop.permute.xlu0 %439
  %vm442 = vcmask 130048
  %v444 = vsel %vm442, %v414, 0
  %v447 = vsel %vm442, %v415, 0
  %v450 = vsel %vm442, %v416, 0
  %v453 = vsel %vm442, %v417, 0
  %455 = vmatprep.subr.mxu0 0.0
  %456 = vmatpush1.msra.mxu0 %v412
  %457 = vmatprep.subr.mxu0 0.0
  %458 = vmatpush1.msra.mxu0 %v413
  %459 = vmatprep.subr.mxu0 0.0
  %460 = vmatpush1.msra.mxu0 0.0
  %461 = vmatprep.subr.mxu0 0.0
  %462 = vmatpush1.msra.mxu0 0.0
  %463 = vmatprep.subr.mxu0 0.0
  %464 = vmatpush1.msra.mxu0 0.0
  %465 = vmatprep.subr.mxu0 0.0
  %466 = vmatpush1.msra.mxu0 0.0
  %467 = vmatprep.subr.mxu0 0.0
  %468 = vmatpush1.msra.mxu0 0.0
  %469 = vmatprep.subr.mxu0 0.0
  %470 = vmatpush1.msra.mxu0 0.0
  %471 = vmatprep.subr.mxu0 0.0
  %472 = vmatpush1.msra.mxu0 0.0
  %473 = vmatprep.subr.mxu0 0.0
  %474 = vmatpush1.msra.mxu0 0.0
  %475 = vmatprep.subr.mxu0 0.0
  %476 = vmatpush1.msra.mxu0 0.0
  %477 = vmatprep.subr.mxu0 0.0
  %478 = vmatpush1.msra.mxu0 0.0
  %479 = vmatprep.subr.mxu0 0.0
  %480 = vmatpush1.msra.mxu0 0.0
  %481 = vmatprep.subr.mxu0 0.0
  %482 = vmatpush1.msra.mxu0 0.0
  %483 = vmatprep.subr.mxu0 0.0
  %484 = vmatpush1.msra.mxu0 0.0
  %485 = vmatprep.subr.mxu0 0.0
  %486 = vmatpush1.msra.mxu0 0.0
  %487 = vmatprep.subr.mxu0 0.0
  %488 = vmatpush1.msra.mxu0 0.0
  %489 = vmatprep.subr.mxu0 0.0
  %490 = vmatpush1.msra.mxu0 0.0
  %491 = vmatprep.subr.mxu0 0.0
  %492 = vmatpush1.msra.mxu0 0.0
  %493 = vmatprep.subr.mxu0 0.0
  %494 = vmatpush1.msra.mxu0 0.0
  %495 = vmatprep.subr.mxu0 0.0
  %496 = vmatpush1.msra.mxu0 0.0
  %497 = vmatprep.subr.mxu0 0.0
  %498 = vmatpush1.msra.mxu0 0.0
  %499 = vmatprep.subr.mxu0 0.0
  %500 = vmatpush1.msra.mxu0 0.0
  %501 = vmatprep.subr.mxu0 0.0
  %502 = vmatpush1.msra.mxu0 0.0
  %503 = vmatprep.subr.mxu0 0.0
  %504 = vmatpush1.msra.mxu0 0.0
  %505 = vmatprep.subr.mxu0 0.0
  %506 = vmatpush1.msra.mxu0 0.0
  %507 = vmatprep.subr.mxu0 0.0
  %508 = vmatpush1.msra.mxu0 0.0
  %509 = vmatprep.subr.mxu0 0.0
  %510 = vmatpush1.msra.mxu0 0.0
  %511 = vmatprep.subr.mxu0 0.0
  %512 = vmatpush1.msra.mxu0 0.0
  %513 = vmatprep.subr.mxu0 0.0
  %514 = vmatpush1.msra.mxu0 0.0
  %515 = vmatprep.subr.mxu0 0.0
  %516 = vmatpush1.msra.mxu0 0.0
  %517 = vmatprep.subr.mxu0 0.0
  %518 = vmatpush1.msra.mxu0 0.0
  %519 = vmatprep.mubr.f32.mxu0 0.0
  %520 = vmatmul.mubr.f32.gmra.mrb[0].mxu0 %v444
  %v521 = vpop.f32.mrb[0].mxu0
  %v522 = vadd.f32 %v425, %v521
  %v523 = vpop.f32.mrb[0].mxu0
  %524 = vmatprep.mubr.f32.mxu0 0.0
  %525 = vmatmul.mubr.f32.gmra.mrb[0].mxu0 %v447
  %v526 = vpop.f32.mrb[0].mxu0
  %v527 = vadd.f32 %v430, %v526
  %v528 = vpop.f32.mrb[0].mxu0
  %529 = vmatprep.mubr.f32.mxu0 0.0
  %530 = vmatmul.mubr.f32.gmra.mrb[0].mxu0 %v450
  %v531 = vpop.f32.mrb[0].mxu0
  %v532 = vadd.f32 %v435, %v531
  %v533 = vpop.f32.mrb[0].mxu0
  %534 = vmatprep.mubr.f32.mxu0 0.0
  %535 = vmatmul.mubr.f32.gmra.mrb[0].mxu0 %v453
  %v536 = vpop.f32.mrb[0].mxu0
  %v537 = vadd.f32 %v440, %v536
  %v538 = vpop.f32.mrb[0].mxu0
  %539 = vdwg.mxu0
  %v540 = vmax.f32 %v522, 0.0
  %v541 = vmax.f32 %v527, 0.0
  %v542 = vmax.f32 %v532, 0.0
  %v543 = vmax.f32 %v537, 0.0
  %v544 = vld [vmem:[%s9] sm:$0xff]
  %v545 = vld [vmem:[%s9 + $0x8] sm:$0xff]
  %v546 = vld [vmem:[%s9 + $0x10] sm:$0xff]
  %v547 = vld [vmem:[%s9 + $0x18] sm:$0xff]
  %v548 = vld [vmem:[%s10] sm:$0xff]
  %v549 = vld [vmem:[%s10 + $0x8] sm:$0xff]
  %v550 = vld [vmem:[%s10 + $0x10] sm:$0xff]
  %v551 = vld [vmem:[%s10 + $0x18] sm:$0xff]
  %553 = vset.pattern.permute.xlu0 0
  %554 = vperm.xlu0 %553, %v548
  %v555 = vpop.permute.xlu0 %554
  %558 = vset.pattern.permute.xlu0 0
  %559 = vperm.xlu0 %558, %v549
  %v560 = vpop.permute.xlu0 %559
  %563 = vset.pattern.permute.xlu0 0
  %564 = vperm.xlu0 %563, %v550
  %v565 = vpop.permute.xlu0 %564
  %568 = vset.pattern.permute.xlu0 0
  %569 = vperm.xlu0 %568, %v551
  %v570 = vpop.permute.xlu0 %569
  %v573 = vsel %vm76, %v544, 0
  %v576 = vsel %vm76, %v545, 0
  %v579 = vsel %vm76, %v546, 0
  %v582 = vsel %vm76, %v547, 0
  %584 = vmatprep.subr.mxu0 0.0
  %585 = vmatpush1.msra.mxu0 %v540
  %586 = vmatprep.subr.mxu0 0.0
  %587 = vmatpush1.msra.mxu0 %v541
  %588 = vmatprep.subr.mxu0 0.0
  %589 = vmatpush1.msra.mxu0 %v542
  %590 = vmatprep.subr.mxu0 0.0
  %591 = vmatpush1.msra.mxu0 %v543
  %592 = vmatprep.subr.mxu0 0.0
  %593 = vmatpush1.msra.mxu0 0.0
  %594 = vmatprep.subr.mxu0 0.0
  %595 = vmatpush1.msra.mxu0 0.0
  %596 = vmatprep.subr.mxu0 0.0
  %597 = vmatpush1.msra.mxu0 0.0
  %598 = vmatprep.subr.mxu0 0.0
  %599 = vmatpush1.msra.mxu0 0.0
  %600 = vmatprep.subr.mxu0 0.0
  %601 = vmatpush1.msra.mxu0 0.0
  %602 = vmatprep.subr.mxu0 0.0
  %603 = vmatpush1.msra.mxu0 0.0
  %604 = vmatprep.subr.mxu0 0.0
  %605 = vmatpush1.msra.mxu0 0.0
  %606 = vmatprep.subr.mxu0 0.0
  %607 = vmatpush1.msra.mxu0 0.0
  %608 = vmatprep.subr.mxu0 0.0
  %609 = vmatpush1.msra.mxu0 0.0
  %610 = vmatprep.subr.mxu0 0.0
  %611 = vmatpush1.msra.mxu0 0.0
  %612 = vmatprep.subr.mxu0 0.0
  %613 = vmatpush1.msra.mxu0 0.0
  %614 = vmatprep.subr.mxu0 0.0
  %615 = vmatpush1.msra.mxu0 0.0
  %616 = vmatprep.subr.mxu0 0.0
  %617 = vmatpush1.msra.mxu0 0.0
  %618 = vmatprep.subr.mxu0 0.0
  %619 = vmatpush1.msra.mxu0 0.0
  %620 = vmatprep.subr.mxu0 0.0
  %621 = vmatpush1.msra.mxu0 0.0
  %622 = vmatprep.subr.mxu0 0.0
  %623 = vmatpush1.msra.mxu0 0.0
  %624 = vmatprep.subr.mxu0 0.0
  %625 = vmatpush1.msra.mxu0 0.0
  %626 = vmatprep.subr.mxu0 0.0
  %627 = vmatpush1.msra.mxu0 0.0
  %628 = vmatprep.subr.mxu0 0.0
  %629 = vmatpush1.msra.mxu0 0.0
  %630 = vmatprep.subr.mxu0 0.0
  %631 = vmatpush1.msra.mxu0 0.0
  %632 = vmatprep.subr.mxu0 0.0
  %633 = vmatpush1.msra.mxu0 0.0
  %634 = vmatprep.subr.mxu0 0.0
  %635 = vmatpush1.msra.mxu0 0.0
  %636 = vmatprep.subr.mxu0 0.0
  %637 = vmatpush1.msra.mxu0 0.0
  %638 = vmatprep.subr.mxu0 0.0
  %639 = vmatpush1.msra.mxu0 0.0
  %640 = vmatprep.subr.mxu0 0.0
  %641 = vmatpush1.msra.mxu0 0.0
  %642 = vmatprep.subr.mxu0 0.0
  %643 = vmatpush1.msra.mxu0 0.0
  %644 = vmatprep.subr.mxu0 0.0
  %645 = vmatpush1.msra.mxu0 0.0
  %646 = vmatprep.subr.mxu0 0.0
  %647 = vmatpush1.msra.mxu0 0.0
  %648 = vmatprep.mubr.f32.mxu0 0.0
  %649 = vmatmul.mubr.f32.gmra.mrb[0].mxu0 %v573
  %v650 = vpop.f32.mrb[0].mxu0
  %v651 = vadd.f32 %v555, %v650
  %v652 = vpop.f32.mrb[0].mxu0
  %653 = vmatprep.mubr.f32.mxu0 0.0
  %654 = vmatmul.mubr.f32.gmra.mrb[0].mxu0 %v576
  %v655 = vpop.f32.mrb[0].mxu0
  %v656 = vadd.f32 %v560, %v655
  %v657 = vpop.f32.mrb[0].mxu0
  %658 = vmatprep.mubr.f32.mxu0 0.0
  %659 = vmatmul.mubr.f32.gmra.mrb[0].mxu0 %v579
  %v660 = vpop.f32.mrb[0].mxu0
  %v661 = vadd.f32 %v565, %v660
  %v662 = vpop.f32.mrb[0].mxu0
  %663 = vmatprep.mubr.f32.mxu0 0.0
  %664 = vmatmul.mubr.f32.gmra.mrb[0].mxu0 %v582
  %v665 = vpop.f32.mrb[0].mxu0
  %v666 = vadd.f32 %v570, %v665
  %v667 = vpop.f32.mrb[0].mxu0
  %668 = vdwg.mxu0
  %v669 = vmax.f32 %v651, 0.0
  %v670 = vmax.f32 %v656, 0.0
  %v671 = vmax.f32 %v661, 0.0
  %v672 = vmax.f32 %v666, 0.0
  %v673 = vld [vmem:[%s11] sm:$0xff]
  %v674 = vld [vmem:[%s12] sm:$0xff]
  %676 = vset.pattern.permute.xlu0 0
  %677 = vperm.xlu0 %676, %v674
  %v678 = vpop.permute.xlu0 %677
  %v681 = vsel %vm76, %v673, 0
  %683 = vmatprep.subr.mxu0 0.0
  %684 = vmatpush1.msra.mxu0 %v669
  %685 = vmatprep.subr.mxu0 0.0
  %686 = vmatpush1.msra.mxu0 %v670
  %687 = vmatprep.subr.mxu0 0.0
  %688 = vmatpush1.msra.mxu0 %v671
  %689 = vmatprep.subr.mxu0 0.0
  %690 = vmatpush1.msra.mxu0 %v672
  %691 = vmatprep.subr.mxu0 0.0
  %692 = vmatpush1.msra.mxu0 0.0
  %693 = vmatprep.subr.mxu0 0.0
  %694 = vmatpush1.msra.mxu0 0.0
  %695 = vmatprep.subr.mxu0 0.0
  %696 = vmatpush1.msra.mxu0 0.0
  %697 = vmatprep.subr.mxu0 0.0
  %698 = vmatpush1.msra.mxu0 0.0
  %699 = vmatprep.subr.mxu0 0.0
  %700 = vmatpush1.msra.mxu0 0.0
  %701 = vmatprep.subr.mxu0 0.0
  %702 = vmatpush1.msra.mxu0 0.0
  %703 = vmatprep.subr.mxu0 0.0
  %704 = vmatpush1.msra.mxu0 0.0
  %705 = vmatprep.subr.mxu0 0.0
  %706 = vmatpush1.msra.mxu0 0.0
  %707 = vmatprep.subr.mxu0 0.0
  %708 = vmatpush1.msra.mxu0 0.0
  %709 = vmatprep.subr.mxu0 0.0
  %710 = vmatpush1.msra.mxu0 0.0
  %711 = vmatprep.subr.mxu0 0.0
  %712 = vmatpush1.msra.mxu0 0.0
  %713 = vmatprep.subr.mxu0 0.0
  %714 = vmatpush1.msra.mxu0 0.0
  %715 = vmatprep.subr.mxu0 0.0
  %716 = vmatpush1.msra.mxu0 0.0
  %717 = vmatprep.subr.mxu0 0.0
  %718 = vmatpush1.msra.mxu0 0.0
  %719 = vmatprep.subr.mxu0 0.0
  %720 = vmatpush1.msra.mxu0 0.0
  %721 = vmatprep.subr.mxu0 0.0
  %722 = vmatpush1.msra.mxu0 0.0
  %723 = vmatprep.subr.mxu0 0.0
  %724 = vmatpush1.msra.mxu0 0.0
  %725 = vmatprep.subr.mxu0 0.0
  %726 = vmatpush1.msra.mxu0 0.0
  %727 = vmatprep.subr.mxu0 0.0
  %728 = vmatpush1.msra.mxu0 0.0
  %729 = vmatprep.subr.mxu0 0.0
  %730 = vmatpush1.msra.mxu0 0.0
  %731 = vmatprep.subr.mxu0 0.0
  %732 = vmatpush1.msra.mxu0 0.0
  %733 = vmatprep.subr.mxu0 0.0
  %734 = vmatpush1.msra.mxu0 0.0
  %735 = vmatprep.subr.mxu0 0.0
  %736 = vmatpush1.msra.mxu0 0.0
  %737 = vmatprep.subr.mxu0 0.0
  %738 = vmatpush1.msra.mxu0 0.0
  %739 = vmatprep.subr.mxu0 0.0
  %740 = vmatpush1.msra.mxu0 0.0
  %741 = vmatprep.subr.mxu0 0.0
  %742 = vmatpush1.msra.mxu0 0.0
  %743 = vmatprep.subr.mxu0 0.0
  %744 = vmatpush1.msra.mxu0 0.0
  %745 = vmatprep.subr.mxu0 0.0
  %746 = vmatpush1.msra.mxu0 0.0
  %747 = vmatprep.mubr.f32.mxu0 0.0
  %748 = vmatmul.mubr.f32.gmra.mrb[0].mxu0 %v681
  %v749 = vpop.f32.mrb[0].mxu0
  %v750 = vadd.f32 %v678, %v749
  %v751 = vpop.f32.mrb[0].mxu0
  %752 = vdwg.mxu0
  %753 = vst [vmem:[%s13] sm:$0xff] %v750
  // Predicated region
  $region54: #{dqn_forward.1} parent=0 // pred_check
    _
  $region55: #{dqn_forward.1} parent=0 // pred_check_branch
    %755 = sbr.rel (0) target = $region57
  $region56: #{dqn_forward.1} parent=0 // pred_region
    _
  $region57: #{dqn_forward.1} parent=0 // pred_fallthru
    _
  // Predicated region
  $region58: #{dqn_forward.1} parent=0 // pred_check
    _
  $region59: #{dqn_forward.1} parent=0 // pred_check_branch
    %757 = sbr.rel (0) target = $region61
  $region60: #{dqn_forward.1} parent=0 // pred_region
    _
  $region61: #{dqn_forward.1} parent=0 // pred_fallthru
    _

</llo_original>
